<compile_context>
chip_gen: v7x
topology: tpu7x:2x2x1
jax: 0.10.0
libtpu: 0.0.40
codegen_flags: <defaults>
</compile_context>

<pallas_src>
import functools

import jax
import jax.numpy as jnp
from jax.experimental import pallas as pl
from jax.experimental.pallas import tpu as pltpu


def _row_box_sum(xp_ref, length, k, out_len):
    """k-tap running sum along the leading (row) axis of the padded scratch,
    returned as an f32 value with leading extent `out_len`.

    Doubling tree (~log2(k)+popcount(k)-1 adds instead of k-1); base slabs are
    read straight from the ref (leading-dim slices are cheap address picks)."""
    def base(start, size):
        return xp_ref[start:start + size].astype(jnp.float32)

    sums = {}
    if k >= 2:
        sums[2] = base(0, length - 1) + base(1, length - 1)
        p = 2
        while 2 * p <= k:
            prev = sums[p]
            ext = length - 2 * p + 1
            sums[2 * p] = prev[:ext] + prev[p:p + ext]
            p *= 2

    res = None
    off = 0
    pp = 1 << (k.bit_length() - 1)
    rem = k
    while rem > 0:
        if rem >= pp:
            piece = base(off, out_len) if pp == 1 else sums[pp][off:off + out_len]
            res = piece if res is None else res + piece
            off += pp
            rem -= pp
        pp //= 2
    return res


def _col_box_sum(racc, k, w_out, base_off):
    """k-tap running sum along the W (sublane) axis of `racc`, starting at
    column offset `base_off`: out[:, j, :] = sum_d racc[:, j+base_off+d, :].

    Uses pltpu.roll (XLU) in a doubling tree instead of unaligned sublane
    slices; for the kept output columns no roll ever wraps around."""
    ws = racc.shape[1]

    def shifted(x, m):
        m = m % ws
        if m == 0:
            return x
        return pltpu.roll(x, shift=ws - m, axis=1)   # out[:, j] = x[:, j + m]

    sums = {1: racc}
    p = 1
    while 2 * p <= k:
        sums[2 * p] = sums[p] + shifted(sums[p], p)
        p *= 2

    res = None
    off = base_off
    pp = 1 << (k.bit_length() - 1)
    rem = k
    while rem > 0:
        if rem >= pp:
            piece = shifted(sums[pp], off)
            res = piece if res is None else res + piece
            off += pp
            rem -= pp
        pp //= 2
    return res[:, :w_out, :]


def _avgpool_kernel(x_ref, o_ref, xp_ref, racc_ref, *,
                    k, pad, align, h, w, w_out, th_out, num_row_tiles, row_axis):
    # x_ref   : (H, W, BC)           full-height input block (lanes = planes)
    # o_ref   : (th_out, W_out, BC)  output row tile
    # xp_ref  : (th_pad, WS, BC)     padded scratch for this row tile
    # racc_ref: (th_out, WS, BC)     f32 row-sum accumulator
    th_pad = th_out + k - 1
    ws = xp_ref.shape[1]
    bc = xp_ref.shape[2]
    zdt = xp_ref.dtype
    r = pl.program_id(row_axis)
    c0 = h if num_row_tiles == 1 else th_pad - pad   # rows copied on edge tiles

    # Fused padding: only the border strips are cleared, the interior is fully
    # overwritten below.  Column strips every step; row strips only on the edge
    # row tiles (required semantically, correct under megacore sharding).
    if align > 0:                                     # left pad strip (aligned)
        xp_ref[:, 0:align, :] = jnp.zeros((th_pad, align, bc), zdt)
    if ws > align + w:                                # right pad strip
        xp_ref[:, align + w:ws, :] = jnp.zeros((th_pad, ws - align - w, bc), zdt)

    if num_row_tiles == 1:
        if pad > 0:
            xp_ref[0:pad, :, :] = jnp.zeros((pad, ws, bc), zdt)
            xp_ref[pad + h:th_pad, :, :] = jnp.zeros((pad, ws, bc), zdt)
        xp_ref[pad:pad + h, align:align + w, :] = x_ref[...].astype(zdt)
    else:
        @pl.when(r == 0)
        def _first_tile():
            if pad > 0:
                xp_ref[0:pad, :, :] = jnp.zeros((pad, ws, bc), zdt)
            xp_ref[pad:pad + c0, align:align + w, :] = x_ref[0:c0, :, :].astype(zdt)

        @pl.when(r == num_row_tiles - 1)
        def _last_tile():
            s0 = (num_row_tiles - 1) * th_out - pad   # static in this branch
            if pad > 0:
                xp_ref[c0:th_pad, :, :] = jnp.zeros((th_pad - c0, ws, bc), zdt)
            xp_ref[0:c0, align:align + w, :] = x_ref[s0:s0 + c0, :, :].astype(zdt)

        if num_row_tiles >= 3:
            @pl.when(jnp.logical_and(r > 0, r < num_row_tiles - 1))
            def _middle_tile():
                s0 = r * th_out - pad                 # dynamic start, static size
                xp_ref[0:th_pad, align:align + w, :] = (
                    x_ref[pl.ds(s0, th_pad), :, :].astype(zdt))

    # Separable box filter: rows (ref slices -> VMEM accumulator), then columns
    # (roll tree); the align-pad offset is folded into the column shifts.
    racc_ref[...] = _row_box_sum(xp_ref, th_pad, k, th_out)
    acc = _col_box_sum(racc_ref[...], k, w_out, align - pad)
    o_ref[...] = (acc * (1.0 / (k * k))).astype(o_ref.dtype)


def _round_up(v, m):
    return -(-v // m) * m


def _pick_row_tile(h_out, h, pad, k, want_multi, fits):
    """Largest divisor of h_out fitting the VMEM budget, preferring >=2 row
    tiles (so a 2-core chip gets parallel grid steps) when halo guards allow."""
    divs = sorted((d for d in range(1, h_out + 1) if h_out % d == 0), reverse=True)

    def ok_multi(d):
        n = h_out // d
        if n < 2:
            return False
        if not (pad <= d <= h_out - pad):      # edge-tile halo fits the input
            return False
        if n >= 3 and d + k - 1 > h:           # middle-tile halo fits the input
            return False
        return True

    if not want_multi and fits(h_out):
        return h_out
    for d in divs:                              # largest multi-tile that fits
        if ok_multi(d) and fits(d):
            return d
    if fits(h_out):
        return h_out
    for d in reversed(divs):                    # nothing fits: smallest viable
        if h_out // d == 1 or ok_multi(d):
            return d
    return h_out


def transform_loss_block(input_image, k_size=10):
    """Pallas equivalent of TransformLossBlock.forward (AvgPool2d, stride=1)."""
    k = int(k_size)
    pad = (k - 1) // 2
    n, c, h, w = input_image.shape
    h_out = h + 2 * pad - k + 1
    w_out = w + 2 * pad - k + 1
    nc = n * c

    # Lane-dense channels-last layout: (N, C, H, W) -> (H, W, N*C), with N*C
    # zero-padded to a multiple of 128 lanes (padded planes sliced off at end).
    bc = 128
    nc_pad = _round_up(nc, bc)
    x_cl = jnp.transpose(input_image.reshape(nc, h, w), (1, 2, 0))
    if nc_pad != nc:
        x_cl = jnp.pad(x_cl, ((0, 0), (0, 0), (0, nc_pad - nc)))
    num_chan_tiles = nc_pad // bc

    # Scratch W layout: left pad rounded up to 8 sublanes so the interior copy
    # starts sublane-aligned; total width rounded to 8.
    align = _round_up(pad, 8) if pad > 0 else 0
    ws = _round_up(align + w + pad, 8)

    # Per-generation VMEM budget (v7x: 64 MiB physical, v5e/v6e: 128 MiB).
    try:
        vmem_cap = int(getattr(pltpu.get_tpu_info(), "vmem_capacity_bytes", 0)) or (64 << 20)
    except Exception:
        vmem_cap = 64 << 20
    budget = int(0.65 * vmem_cap)

    in_isz = jnp.dtype(input_image.dtype).itemsize
    scratch_dtype = jnp.bfloat16 if input_image.dtype == jnp.bfloat16 else jnp.float32
    s_isz = jnp.dtype(scratch_dtype).itemsize

    def vmem_need(th):
        th_pad_ = th + k - 1
        need = 2 * h * _round_up(w, 8) * bc * in_isz          # input block (x2 buffers)
        need += 2 * th * _round_up(w_out, 8) * bc * in_isz    # output block (x2 buffers)
        need += th_pad_ * ws * bc * s_isz                     # padded scratch
        need += th * ws * bc * 4                              # f32 row accumulator
        return need + (2 << 20)                               # fudge for internals

    th_out = _pick_row_tile(h_out, h, pad, k,
                            want_multi=(num_chan_tiles < 2),
                            fits=lambda d: vmem_need(d) <= budget)
    num_row_tiles = h_out // th_out
    th_pad = th_out + k - 1
    # TODO(synk): ragged row tiling (h_out with no suitable divisor) falls back
    # to a single full-height tile; add a masked last tile if that ever matters.

    # Row axis outermost when there is only one channel tile (so a 2-core chip
    # can shard the grid); otherwise channels outermost so the full-height input
    # block is fetched once per channel tile (block index constant across rows).
    if num_chan_tiles == 1:
        grid = (num_row_tiles, num_chan_tiles)
        row_axis = 0
        in_map = lambda r, ci: (0, 0, ci)
        out_map = lambda r, ci: (r, 0, ci)
    else:
        grid = (num_chan_tiles, num_row_tiles)
        row_axis = 1
        in_map = lambda ci, r: (0, 0, ci)
        out_map = lambda ci, r: (r, 0, ci)

    tree_adds = (k.bit_length() - 1) + max(bin(k).count("1") - 1, 0)
    cost = pl.CostEstimate(
        flops=int(nc_pad * ws * tree_adds * (2 * h_out + k - 1)
                  + nc_pad * h_out * w_out),
        transcendentals=0,
        bytes_accessed=int(nc_pad * (h * w + h_out * w_out) * in_isz),
    )

    vmem_limit = int(min(max(budget, vmem_need(th_out) + (4 << 20), 32 << 20),
                         int(0.9 * vmem_cap)))

    kernel = functools.partial(
        _avgpool_kernel, k=k, pad=pad, align=align, h=h, w=w, w_out=w_out,
        th_out=th_out, num_row_tiles=num_row_tiles, row_axis=row_axis)

    out_cl = pl.pallas_call(
        kernel,
        out_shape=jax.ShapeDtypeStruct((h_out, w_out, nc_pad), input_image.dtype),
        grid=grid,
        in_specs=[pl.BlockSpec((h, w, bc), in_map)],
        out_specs=pl.BlockSpec((th_out, w_out, bc), out_map),
        scratch_shapes=[pltpu.VMEM((th_pad, ws, bc), scratch_dtype),
                        pltpu.VMEM((th_out, ws, bc), jnp.float32)],
        compiler_params=pltpu.CompilerParams(
            dimension_semantics=("parallel", "parallel"),
            vmem_limit_bytes=vmem_limit,
        ),
        cost_estimate=cost,
    )(x_cl)

    # (H_out, W_out, nc_pad) -> (N, C, H_out, W_out)
    out = out_cl[:, :, :nc]
    return jnp.transpose(out, (2, 0, 1)).reshape(n, c, h_out, w_out)


def _reference_avgpool(input_image, k_size=10):
    """Plain-JAX reference matching nn.AvgPool2d(k, stride=1, pad=(k-1)//2)."""
    pad = (k_size - 1) // 2
    summed = jax.lax.reduce_window(
        input_image, 0.0, jax.lax.add,
        window_dimensions=(1, 1, k_size, k_size),
        window_strides=(1, 1, 1, 1),
        padding=((0, 0), (0, 0), (pad, pad), (pad, pad)),
    )
    return summed / float(k_size * k_size)


if __name__ == "__main__":
    key = jax.random.PRNGKey(0)
    x = jax.random.normal(key, (2, 4, 16, 16), dtype=jnp.float32)

    out = jax.block_until_ready(transform_loss_block(x, k_size=10))
    ref = jax.block_until_ready(_reference_avgpool(x, k_size=10))

    assert out.shape == (2, 4, 15, 15), out.shape
    assert jnp.max(jnp.abs(out - ref)) < 1e-5, "mismatch vs reference"

    print("KERNEL_OK")
</pallas_src>

<mosaic_0001>
module attributes {stable_mosaic.version = 11 : i64} {
  func.func @_avgpool_kernel(%arg0: i32, %arg1: i32, %arg2: memref<16x16x128xf32, #tpu.memory_space<vmem>>, %arg3: memref<5x15x128xf32, #tpu.memory_space<vmem>>, %arg4: memref<14x32x128xf32, #tpu.memory_space<vmem>>, %arg5: memref<5x32x128xf32, #tpu.memory_space<vmem>>) attributes {dimension_semantics = [#tpu.dimension_semantics<parallel>, #tpu.dimension_semantics<parallel>], iteration_bounds = array<i64: 3, 1>, scalar_prefetch = 0 : i64, scratch_operands = 2 : i64, tpu.core_type = #tpu.core_type<tc>, window_params = [{transform_indices = @transform_0, window_bounds = array<i64: 16, 16, 128>}, {transform_indices = @transform_1, window_bounds = array<i64: 5, 15, 128>}]} {
    %cst = arith.constant 0.000000e+00 : f32
    %0 = vector.broadcast %cst : f32 to vector<14x8x128xf32>
    %c0 = arith.constant 0 : index
    %c0_0 = arith.constant 0 : index
    %c0_1 = arith.constant 0 : index
    %1 = vector.load %arg4[%c0, %c0_0, %c0_1] : memref<14x32x128xf32, #tpu.memory_space<vmem>>, vector<14x8x128xf32>
    tpu.vector_store %arg4[%c0, %c0_0, %c0_1], %0 {strides = array<i32>} : memref<14x32x128xf32, #tpu.memory_space<vmem>>, vector<14x8x128xf32>,
    %cst_2 = arith.constant 0.000000e+00 : f32
    %2 = vector.broadcast %cst_2 : f32 to vector<14x8x128xf32>
    %c0_3 = arith.constant 0 : index
    %c24 = arith.constant 24 : index
    %c0_4 = arith.constant 0 : index
    %3 = vector.load %arg4[%c0_3, %c24, %c0_4] : memref<14x32x128xf32, #tpu.memory_space<vmem>>, vector<14x8x128xf32>
    tpu.vector_store %arg4[%c0_3, %c24, %c0_4], %2 {strides = array<i32>} : memref<14x32x128xf32, #tpu.memory_space<vmem>>, vector<14x8x128xf32>,
    %c0_i32 = arith.constant 0 : i32
    %4 = arith.cmpi eq, %arg0, %c0_i32 : i32
    %5 = arith.extui %4 : i1 to i32
    %c0_i32_5 = arith.constant 0 : i32
    %6 = arith.cmpi ne, %5, %c0_i32_5 : i32
    scf.if %6 {
      %cst_26 = arith.constant 0.000000e+00 : f32
      %42 = vector.broadcast %cst_26 : f32 to vector<4x32x128xf32>
      %c0_27 = arith.constant 0 : index
      %c0_28 = arith.constant 0 : index
      %c0_29 = arith.constant 0 : index
      %43 = vector.load %arg4[%c0_27, %c0_28, %c0_29] : memref<14x32x128xf32, #tpu.memory_space<vmem>>, vector<4x32x128xf32>
      tpu.vector_store %arg4[%c0_27, %c0_28, %c0_29], %42 {strides = array<i32>} : memref<14x32x128xf32, #tpu.memory_space<vmem>>, vector<4x32x128xf32>,
      %c0_30 = arith.constant 0 : index
      %c0_31 = arith.constant 0 : index
      %c0_32 = arith.constant 0 : index
      %44 = vector.load %arg2[%c0_30, %c0_31, %c0_32] : memref<16x16x128xf32, #tpu.memory_space<vmem>>, vector<10x16x128xf32>
      %c4 = arith.constant 4 : index
      %c8 = arith.constant 8 : index
      %c0_33 = arith.constant 0 : index
      %45 = vector.load %arg4[%c4, %c8, %c0_33] : memref<14x32x128xf32, #tpu.memory_space<vmem>>, vector<10x16x128xf32>
      tpu.vector_store %arg4[%c4, %c8, %c0_33], %44 {strides = array<i32>} : memref<14x32x128xf32, #tpu.memory_space<vmem>>, vector<10x16x128xf32>,
    } else {
    }
    %c2_i32 = arith.constant 2 : i32
    %7 = arith.cmpi eq, %arg0, %c2_i32 : i32
    %8 = arith.extui %7 : i1 to i32
    %c0_i32_6 = arith.constant 0 : i32
    %9 = arith.cmpi ne, %8, %c0_i32_6 : i32
    scf.if %9 {
      %cst_26 = arith.constant 0.000000e+00 : f32
      %42 = vector.broadcast %cst_26 : f32 to vector<4x32x128xf32>
      %c10 = arith.constant 10 : index
      %c0_27 = arith.constant 0 : index
      %c0_28 = arith.constant 0 : index
      %43 = vector.load %arg4[%c10, %c0_27, %c0_28] : memref<14x32x128xf32, #tpu.memory_space<vmem>>, vector<4x32x128xf32>
      tpu.vector_store %arg4[%c10, %c0_27, %c0_28], %42 {strides = array<i32>} : memref<14x32x128xf32, #tpu.memory_space<vmem>>, vector<4x32x128xf32>,
      %c6 = arith.constant 6 : index
      %c0_29 = arith.constant 0 : index
      %c0_30 = arith.constant 0 : index
      %44 = vector.load %arg2[%c6, %c0_29, %c0_30] : memref<16x16x128xf32, #tpu.memory_space<vmem>>, vector<10x16x128xf32>
      %c0_31 = arith.constant 0 : index
      %c8 = arith.constant 8 : index
      %c0_32 = arith.constant 0 : index
      %45 = vector.load %arg4[%c0_31, %c8, %c0_32] : memref<14x32x128xf32, #tpu.memory_space<vmem>>, vector<10x16x128xf32>
      tpu.vector_store %arg4[%c0_31, %c8, %c0_32], %44 {strides = array<i32>} : memref<14x32x128xf32, #tpu.memory_space<vmem>>, vector<10x16x128xf32>,
    } else {
    }
    %c0_i32_7 = arith.constant 0 : i32
    %10 = arith.cmpi sgt, %arg0, %c0_i32_7 : i32
    %c2_i32_8 = arith.constant 2 : i32
    %11 = arith.cmpi slt, %arg0, %c2_i32_8 : i32
    %12 = arith.andi %10, %11 : i1
    %13 = arith.extui %12 : i1 to i32
    %c0_i32_9 = arith.constant 0 : i32
    %14 = arith.cmpi ne, %13, %c0_i32_9 : i32
    scf.if %14 {
      %c5_i32 = arith.constant 5 : i32
      %42 = arith.muli %arg0, %c5_i32 : i32
      %c4_i32 = arith.constant 4 : i32
      %43 = arith.subi %42, %c4_i32 : i32
      %44 = arith.index_cast %43 : i32 to index
      %c0_26 = arith.constant 0 : index
      %c0_27 = arith.constant 0 : index
      %45 = vector.load %arg2[%44, %c0_26, %c0_27] : memref<16x16x128xf32, #tpu.memory_space<vmem>>, vector<14x16x128xf32>
      %c0_28 = arith.constant 0 : index
      %c8 = arith.constant 8 : index
      %c0_29 = arith.constant 0 : index
      %46 = vector.load %arg4[%c0_28, %c8, %c0_29] : memref<14x32x128xf32, #tpu.memory_space<vmem>>, vector<14x16x128xf32>
      tpu.vector_store %arg4[%c0_28, %c8, %c0_29], %45 {strides = array<i32>} : memref<14x32x128xf32, #tpu.memory_space<vmem>>, vector<14x16x128xf32>,
    } else {
    }
    %c0_10 = arith.constant 0 : index
    %c0_11 = arith.constant 0 : index
    %c0_12 = arith.constant 0 : index
    %15 = vector.load %arg4[%c0_10, %c0_11, %c0_12] : memref<14x32x128xf32, #tpu.memory_space<vmem>>, vector<13x32x128xf32>
    %c1 = arith.constant 1 : index
    %c0_13 = arith.constant 0 : index
    %c0_14 = arith.constant 0 : index
    %16 = vector.load %arg4[%c1, %c0_13, %c0_14] : memref<14x32x128xf32, #tpu.memory_space<vmem>>, vector<13x32x128xf32>
    %17 = arith.addf %15, %16 : vector<13x32x128xf32>
    %18 = vector.extract_strided_slice %17 {offsets = [0, 0, 0], sizes = [11, 32, 128], strides = [1, 1, 1]} : vector<13x32x128xf32> to vector<11x32x128xf32>
    %19 = vector.extract_strided_slice %17 {offsets = [2, 0, 0], sizes = [11, 32, 128], strides = [1, 1, 1]} : vector<13x32x128xf32> to vector<11x32x128xf32>
    %20 = arith.addf %18, %19 : vector<11x32x128xf32>
    %21 = vector.extract_strided_slice %20 {offsets = [0, 0, 0], sizes = [7, 32, 128], strides = [1, 1, 1]} : vector<11x32x128xf32> to vector<7x32x128xf32>
    %22 = vector.extract_strided_slice %20 {offsets = [4, 0, 0], sizes = [7, 32, 128], strides = [1, 1, 1]} : vector<11x32x128xf32> to vector<7x32x128xf32>
    %23 = arith.addf %21, %22 : vector<7x32x128xf32>
    %24 = vector.extract_strided_slice %23 {offsets = [0, 0, 0], sizes = [5, 32, 128], strides = [1, 1, 1]} : vector<7x32x128xf32> to vector<5x32x128xf32>
    %25 = vector.extract_strided_slice %17 {offsets = [8, 0, 0], sizes = [5, 32, 128], strides = [1, 1, 1]} : vector<13x32x128xf32> to vector<5x32x128xf32>
    %26 = arith.addf %24, %25 : vector<5x32x128xf32>
    %c0_15 = arith.constant 0 : index
    %c0_16 = arith.constant 0 : index
    %c0_17 = arith.constant 0 : index
    %27 = vector.load %arg5[%c0_15, %c0_16, %c0_17] : memref<5x32x128xf32, #tpu.memory_space<vmem>>, vector<5x32x128xf32>
    tpu.vector_store %arg5[%c0_15, %c0_16, %c0_17], %26 {strides = array<i32>} : memref<5x32x128xf32, #tpu.memory_space<vmem>>, vector<5x32x128xf32>,
    %c0_18 = arith.constant 0 : index
    %c0_19 = arith.constant 0 : index
    %c0_20 = arith.constant 0 : index
    %28 = vector.load %arg5[%c0_18, %c0_19, %c0_20] : memref<5x32x128xf32, #tpu.memory_space<vmem>>, vector<5x32x128xf32>
    %c31_i32 = arith.constant 31 : i32
    %29 = tpu.dynamic_rotate %28 by %c31_i32 dim 1 : vector<5x32x128xf32>, i32 -> vector<5x32x128xf32>
    %30 = arith.addf %28, %29 : vector<5x32x128xf32>
    %c30_i32 = arith.constant 30 : i32
    %31 = tpu.dynamic_rotate %30 by %c30_i32 dim 1 : vector<5x32x128xf32>, i32 -> vector<5x32x128xf32>
    %32 = arith.addf %30, %31 : vector<5x32x128xf32>
    %c28_i32 = arith.constant 28 : i32
    %33 = tpu.dynamic_rotate %32 by %c28_i32 dim 1 : vector<5x32x128xf32>, i32 -> vector<5x32x128xf32>
    %34 = arith.addf %32, %33 : vector<5x32x128xf32>
    %c28_i32_21 = arith.constant 28 : i32
    %35 = tpu.dynamic_rotate %34 by %c28_i32_21 dim 1 : vector<5x32x128xf32>, i32 -> vector<5x32x128xf32>
    %c20_i32 = arith.constant 20 : i32
    %36 = tpu.dynamic_rotate %30 by %c20_i32 dim 1 : vector<5x32x128xf32>, i32 -> vector<5x32x128xf32>
    %37 = arith.addf %35, %36 : vector<5x32x128xf32>
    %38 = vector.extract_strided_slice %37 {offsets = [0, 0, 0], sizes = [5, 15, 128], strides = [1, 1, 1]} : vector<5x32x128xf32> to vector<5x15x128xf32>
    %cst_22 = arith.constant 0.00999999977 : f32
    %39 = vector.broadcast %cst_22 : f32 to vector<5x15x128xf32>
    %40 = arith.mulf %38, %39 : vector<5x15x128xf32>
    %c0_23 = arith.constant 0 : index
    %c0_24 = arith.constant 0 : index
    %c0_25 = arith.constant 0 : index
    %41 = vector.load %arg3[%c0_23, %c0_24, %c0_25] : memref<5x15x128xf32, #tpu.memory_space<vmem>>, vector<5x15x128xf32>
    tpu.vector_store %arg3[%c0_23, %c0_24, %c0_25], %40 {strides = array<i32>} : memref<5x15x128xf32, #tpu.memory_space<vmem>>, vector<5x15x128xf32>,
    return
  }
  func.func @transform_0(%arg0: i32, %arg1: i32) -> (i32, i32, i32) {
    %c0_i32 = arith.constant 0 : i32
    %c0_i32_0 = arith.constant 0 : i32
    %c0_i32_1 = arith.constant 0 : i32
    return %c0_i32, %c0_i32_0, %arg1 : i32, i32, i32
  }
  func.func @transform_1(%arg0: i32, %arg1: i32) -> (i32, i32, i32) {
    %c0_i32 = arith.constant 0 : i32
    %c0_i32_0 = arith.constant 0 : i32
    return %arg0, %c0_i32, %arg1 : i32, i32, i32
  }
}

</mosaic_0001>

<llo_original>
// kernel: tpu_custom_call.1
$region0: #{tpu_custom_call.1}
  #allocation0 [shape = 'u32[]', space=smem, size = 0x4, offset = 0x4, fixed_abs, tag = 'smem constant byte address 0x4 - core index']
  #allocation1 [shape = 'u32[144,128]{1,0:T(1,128)}', space=vmem, size = 0x12000, scoped, tag = 'internal scratch']
  #allocation2 [shape = 'f32[14,32,128]{2,1,0:T(8,128)}', space=vmem, size = 0x38000, scoped, tag = 'scratch operand']
  #allocation3 [shape = 'f32[5,32,128]{2,1,0:T(8,128)}', space=vmem, size = 0x14000, scoped, tag = 'scratch operand']
  %s0 = inlined_call_operand.hbm [shape: f32[16,16,128], index: 0, kind: input, shape index: {}]
  %s1 = inlined_call_operand.hbm [shape: f32[15,15,128], index: 1, kind: output, shape index: {}]
  %s2 = sld [smem:[#allocation0]]
  $region53: #{tpu_custom_call.1} parent=0
    _
  %s4 = ssub.s32 1, %s2
  %s5 = scalar_select 0, %s4, %s2
  $region1: #{tpu_custom_call.1} parent=0
    #allocation4 [shape = 'u8[131072]{0}', space=vmem, size = 0x20000, scoped, tag = 'input window, operand 0, single buffered']
    #allocation5 [shape = 's32[2]{0}', space=sflag, size = 0x8, scoped, tag = 'scoped memory for tpu_custom_call.1']
    #allocation6 [shape = 's32[2]{0}', space=sflag, size = 0x8, scoped, tag = 'scoped memory for tpu_custom_call.1']
    #allocation7 [shape = 'u8[81920]{0}', space=vmem, size = 0x14000, scoped, tag = 'output window, operand 0']
    %6 = vsyncpa [#allocation5], 0
    %7 = vsyncpa [#allocation6], 0
    %s8 = scalar_lea.sflag [#allocation6], 1
    %9 = vsyncpa %s8, 0
    loop: start=0, step=1, limit=5
    $region2: #{tpu_custom_call.1} parent=1 // loop_pre_header
      _
    $region3: #{tpu_custom_call.1} parent=1 // loop_header
      %s11 = sphi 0, %s15
      %p12 = scmp.ge.s32.totalorder %s11, 5
      %s18 = sphi 0, %s30
      %s19 = sphi 0, %s26
      %s20 = sphi 0, %s18
      %s21 = sphi 0, %s19
      %s22 = sphi 0, %s20
      %s23 = sphi 0, %s21
      %s33 = sphi 0, %s35
      %s36 = sphi 0, %s33
      %s37 = sphi 0, %s36
      %s53 = sphi 0, %s37
      %s61 = sphi 0, %s63
      %s64 = sphi 0, %s61
      %s65 = sphi 0, %s64
      %s81 = sphi 0, %s65
    $region4: #{tpu_custom_call.1} parent=1 // loop_header_branch
      %14 = sbr.rel (%p12) target = $region8
    $region5: #{tpu_custom_call.1} parent=1 // loop_body
      %s16 = ssub.s32 %s11, 1
      %s17 = ssub.s32 %s11, 2
      %s24 = sadd.s32 1, %s19
      %p25 = scmp.ge.s32.totalorder %s24, 1
      %s26 = scalar_select %p25, 0, %s24
      %s27 = sadd.s32 1, %s18
      %s28 = scalar_select %p25, %s27, %s18
      %p29 = scmp.ge.s32.totalorder %s28, 3
      %s30 = scalar_select %p29, 0, %s28
      %s31 = ssub.s32 %s19, %s26
      %p32 = scmp.eq.s32.totalorder %s31, 0
      %s34 = sadd.s32 %s33, 1
      %s35 = scalar_select %p32, %s33, %s34
      %p38 = pneg %p32
      %p39 = scmp.eq.s32.totalorder %s11, 2
      %p40 = por %p38, %p39
      %p41 = scmp.ne.s32.totalorder %s33, %s36
      %p42 = scmp.eq.s32.totalorder %s11, 0
      %p43 = por %p41, %p42
      %p44 = scmp.ne.s32.totalorder %s33, %s36
      %p45 = scmp.eq.s32.totalorder %s16, 2
      %p46 = por %p44, %p45
      %p47 = scmp.ne.s32.totalorder %s36, %s37
      %p48 = scmp.eq.s32.totalorder %s16, 0
      %p49 = por %p47, %p48
      %p50 = scmp.ne.s32.totalorder %s36, %s37
      %p51 = scmp.eq.s32.totalorder %s17, 2
      %p52 = por %p50, %p51
      %p54 = scmp.ne.s32.totalorder %s37, %s53
      %p55 = scmp.eq.s32.totalorder %s17, 0
      %p56 = por %p54, %p55
      %s57 = ssub.s32 %s18, %s30
      %s58 = ssub.s32 %s19, %s26
      %s59 = sor.u32 %s57, %s58
      %p60 = scmp.eq.s32.totalorder %s59, 0
      %s62 = sadd.s32 %s61, 1
      %s63 = scalar_select %p60, %s61, %s62
      %p66 = pneg %p60
      %p67 = scmp.eq.s32.totalorder %s11, 2
      %p68 = por %p66, %p67
      %p69 = scmp.ne.s32.totalorder %s61, %s64
      %p70 = scmp.eq.s32.totalorder %s11, 0
      %p71 = por %p69, %p70
      %p72 = scmp.ne.s32.totalorder %s61, %s64
      %p73 = scmp.eq.s32.totalorder %s16, 2
      %p74 = por %p72, %p73
      %p75 = scmp.ne.s32.totalorder %s64, %s65
      %p76 = scmp.eq.s32.totalorder %s16, 0
      %p77 = por %p75, %p76
      %p78 = scmp.ne.s32.totalorder %s64, %s65
      %p79 = scmp.eq.s32.totalorder %s17, 2
      %p80 = por %p78, %p79
      %p82 = scmp.ne.s32.totalorder %s65, %s81
      %p83 = scmp.eq.s32.totalorder %s17, 0
      %p84 = por %p82, %p83
      %p85 = scmp.le.s32.totalorder 1, %s11
      %p86 = scmp.lt.s32.totalorder %s11, 4
      %p87 = pnand %p85, %p86
      %p88 = pneg %p87
      // Predicated region
      $region9: #{tpu_custom_call.1} parent=5 // pred_check
        _
      $region10: #{tpu_custom_call.1} parent=5 // pred_check_branch
        %90 = sbr.rel (%p87) target = $region12
      $region11: #{tpu_custom_call.1} parent=5 // pred_region
        %s91 = ssub.s32 %s11, 1
        // Predicated region
        $region13: #{tpu_custom_call.1} parent=11 // pred_check
          %p92 = pneg %p49
        $region14: #{tpu_custom_call.1} parent=11 // pred_check_branch
          %94 = sbr.rel (%p92) target = $region16
        $region15: #{tpu_custom_call.1} parent=11 // pred_region
          %s96 = ssub.s32 4096, 4096
          %97 = vsyncadd [#allocation5], %s96
          %s98 = smul.addr %s21, 128
          %s99 = scalar_lea.hbm %s0, %s98
          %s100 = sshll.u32 [#allocation4], 4
          %s101 = int_to_ptr.vmem [resolvable:$true] %s100
          %106 = dma.hbm_to_vmem [thread:$0]  %s99, 4096, %s101, [#allocation5], 128, 128, 8
        $region16: #{tpu_custom_call.1} parent=11 // pred_fallthru
          _
      $region12: #{tpu_custom_call.1} parent=5 // pred_fallthru
        _
      %p107 = scmp.lt.s32.totalorder %s11, 3
      // Predicated region
      $region17: #{tpu_custom_call.1} parent=5 // pred_check
        %p108 = pneg %p107
      $region18: #{tpu_custom_call.1} parent=5 // pred_check_branch
        %110 = sbr.rel (%p108) target = $region20
      $region19: #{tpu_custom_call.1} parent=5 // pred_region
        _
      $region20: #{tpu_custom_call.1} parent=5 // pred_fallthru
        _
      %p111 = scmp.le.s32.totalorder 1, %s11
      %p112 = scmp.lt.s32.totalorder %s11, 4
      %p113 = pnand %p111, %p112
      %p114 = pneg %p113
      // Predicated region
      $region21: #{tpu_custom_call.1} parent=5 // pred_check
        _
      $region22: #{tpu_custom_call.1} parent=5 // pred_check_branch
        %116 = sbr.rel (%p113) target = $region24
      $region23: #{tpu_custom_call.1} parent=5 // pred_region
        %s117 = ssub.s32 %s11, 1
        // Predicated region
        $region25: #{tpu_custom_call.1} parent=23 // pred_check
          %p118 = pneg %p49
        $region26: #{tpu_custom_call.1} parent=23 // pred_check_branch
          %120 = sbr.rel (%p118) target = $region28
        $region27: #{tpu_custom_call.1} parent=23 // pred_region
          %121 = dma.done [#allocation5], 4096
        $region28: #{tpu_custom_call.1} parent=23 // pred_fallthru
          _
        %p122 = pneg %p49
        %p123 = pneg %p46
        %p124 = pneg %p77
        %p125 = pneg %p74
        %s126 = sand.u32 %s64, 1
        %s127 = scalar_lea.sflag [#allocation6], %s126
        %s128 = sand.u32 %s64, 1
        %s129 = smul.addr %s128, 80
        %s130 = scalar_lea.vmem [#allocation7], %s129
        %s131 = smul.u32 5, %s20
        %132 = vst [vmem:[#allocation2] sm:$0xff] 0.0
        %133 = vst [vmem:[#allocation2 + $0x20] sm:$0xff] 0.0
        %134 = vst [vmem:[#allocation2 + $0x40] sm:$0xff] 0.0
        %135 = vst [vmem:[#allocation2 + $0x60] sm:$0xff] 0.0
        %136 = vst [vmem:[#allocation2 + $0x80] sm:$0xff] 0.0
        %137 = vst [vmem:[#allocation2 + $0xa0] sm:$0xff] 0.0
        %138 = vst [vmem:[#allocation2 + $0xc0] sm:$0xff] 0.0
        %139 = vst [vmem:[#allocation2 + $0xe0] sm:$0xff] 0.0
        %140 = vst [vmem:[#allocation2 + $0x100] sm:$0xff] 0.0
        %141 = vst [vmem:[#allocation2 + $0x120] sm:$0xff] 0.0
        %142 = vst [vmem:[#allocation2 + $0x140] sm:$0xff] 0.0
        %143 = vst [vmem:[#allocation2 + $0x160] sm:$0xff] 0.0
        %144 = vst [vmem:[#allocation2 + $0x180] sm:$0xff] 0.0
        %145 = vst [vmem:[#allocation2 + $0x1a0] sm:$0xff] 0.0
        %146 = vst [vmem:[#allocation2 + $0x18] sm:$0xff] 0.0
        %147 = vst [vmem:[#allocation2 + $0x38] sm:$0xff] 0.0
        %148 = vst [vmem:[#allocation2 + $0x58] sm:$0xff] 0.0
        %149 = vst [vmem:[#allocation2 + $0x78] sm:$0xff] 0.0
        %150 = vst [vmem:[#allocation2 + $0x98] sm:$0xff] 0.0
        %151 = vst [vmem:[#allocation2 + $0xb8] sm:$0xff] 0.0
        %152 = vst [vmem:[#allocation2 + $0xd8] sm:$0xff] 0.0
        %153 = vst [vmem:[#allocation2 + $0xf8] sm:$0xff] 0.0
        %154 = vst [vmem:[#allocation2 + $0x118] sm:$0xff] 0.0
        %155 = vst [vmem:[#allocation2 + $0x138] sm:$0xff] 0.0
        %156 = vst [vmem:[#allocation2 + $0x158] sm:$0xff] 0.0
        %157 = vst [vmem:[#allocation2 + $0x178] sm:$0xff] 0.0
        %158 = vst [vmem:[#allocation2 + $0x198] sm:$0xff] 0.0
        %159 = vst [vmem:[#allocation2 + $0x1b8] sm:$0xff] 0.0
        %p160 = scmp.eq.s32.totalorder %s20, 0
        // Predicated region
        $region29: #{tpu_custom_call.1} parent=23 // pred_check
          %p161 = pneg %p160
        $region30: #{tpu_custom_call.1} parent=23 // pred_check_branch
          %163 = sbr.rel (%p161) target = $region32
        $region31: #{tpu_custom_call.1} parent=23 // pred_region
          %164 = vst [vmem:[#allocation2] sm:$0xff] 0.0
          %165 = vst [vmem:[#allocation2 + $0x8] sm:$0xff] 0.0
          %166 = vst [vmem:[#allocation2 + $0x10] sm:$0xff] 0.0
          %167 = vst [vmem:[#allocation2 + $0x18] sm:$0xff] 0.0
          %168 = vst [vmem:[#allocation2 + $0x20] sm:$0xff] 0.0
          %169 = vst [vmem:[#allocation2 + $0x28] sm:$0xff] 0.0
          %170 = vst [vmem:[#allocation2 + $0x30] sm:$0xff] 0.0
          %171 = vst [vmem:[#allocation2 + $0x38] sm:$0xff] 0.0
          %172 = vst [vmem:[#allocation2 + $0x40] sm:$0xff] 0.0
          %173 = vst [vmem:[#allocation2 + $0x48] sm:$0xff] 0.0
          %174 = vst [vmem:[#allocation2 + $0x50] sm:$0xff] 0.0
          %175 = vst [vmem:[#allocation2 + $0x58] sm:$0xff] 0.0
          %176 = vst [vmem:[#allocation2 + $0x60] sm:$0xff] 0.0
          %177 = vst [vmem:[#allocation2 + $0x68] sm:$0xff] 0.0
          %178 = vst [vmem:[#allocation2 + $0x70] sm:$0xff] 0.0
          %179 = vst [vmem:[#allocation2 + $0x78] sm:$0xff] 0.0
          %v180 = vld [vmem:[#allocation4] sm:$0xff]
          %v181 = vld [vmem:[#allocation4 + $0x8] sm:$0xff]
          %v182 = vld [vmem:[#allocation4 + $0x10] sm:$0xff]
          %v183 = vld [vmem:[#allocation4 + $0x18] sm:$0xff]
          %v184 = vld [vmem:[#allocation4 + $0x20] sm:$0xff]
          %v185 = vld [vmem:[#allocation4 + $0x28] sm:$0xff]
          %v186 = vld [vmem:[#allocation4 + $0x30] sm:$0xff]
          %v187 = vld [vmem:[#allocation4 + $0x38] sm:$0xff]
          %v188 = vld [vmem:[#allocation4 + $0x40] sm:$0xff]
          %v189 = vld [vmem:[#allocation4 + $0x48] sm:$0xff]
          %v190 = vld [vmem:[#allocation4 + $0x50] sm:$0xff]
          %v191 = vld [vmem:[#allocation4 + $0x58] sm:$0xff]
          %v192 = vld [vmem:[#allocation4 + $0x60] sm:$0xff]
          %v193 = vld [vmem:[#allocation4 + $0x68] sm:$0xff]
          %v194 = vld [vmem:[#allocation4 + $0x70] sm:$0xff]
          %v195 = vld [vmem:[#allocation4 + $0x78] sm:$0xff]
          %v196 = vld [vmem:[#allocation4 + $0x80] sm:$0xff]
          %v197 = vld [vmem:[#allocation4 + $0x88] sm:$0xff]
          %v198 = vld [vmem:[#allocation4 + $0x90] sm:$0xff]
          %v199 = vld [vmem:[#allocation4 + $0x98] sm:$0xff]
          %s200 = scalar_lea.vmem [#allocation2], 128
          %201 = vst [vmem:[%s200 + $0x8] sm:$0xff] %v180
          %202 = vst [vmem:[%s200 + $0x10] sm:$0xff] %v181
          %203 = vst [vmem:[%s200 + $0x28] sm:$0xff] %v182
          %204 = vst [vmem:[%s200 + $0x30] sm:$0xff] %v183
          %205 = vst [vmem:[%s200 + $0x48] sm:$0xff] %v184
          %206 = vst [vmem:[%s200 + $0x50] sm:$0xff] %v185
          %207 = vst [vmem:[%s200 + $0x68] sm:$0xff] %v186
          %208 = vst [vmem:[%s200 + $0x70] sm:$0xff] %v187
          %209 = vst [vmem:[%s200 + $0x88] sm:$0xff] %v188
          %210 = vst [vmem:[%s200 + $0x90] sm:$0xff] %v189
          %211 = vst [vmem:[%s200 + $0xa8] sm:$0xff] %v190
          %212 = vst [vmem:[%s200 + $0xb0] sm:$0xff] %v191
          %213 = vst [vmem:[%s200 + $0xc8] sm:$0xff] %v192
          %214 = vst [vmem:[%s200 + $0xd0] sm:$0xff] %v193
          %215 = vst [vmem:[%s200 + $0xe8] sm:$0xff] %v194
          %216 = vst [vmem:[%s200 + $0xf0] sm:$0xff] %v195
          %217 = vst [vmem:[%s200 + $0x108] sm:$0xff] %v196
          %218 = vst [vmem:[%s200 + $0x110] sm:$0xff] %v197
          %219 = vst [vmem:[%s200 + $0x128] sm:$0xff] %v198
          %220 = vst [vmem:[%s200 + $0x130] sm:$0xff] %v199
        $region32: #{tpu_custom_call.1} parent=23 // pred_fallthru
          _
        %p221 = scmp.eq.s32.totalorder %s20, 2
        // Predicated region
        $region33: #{tpu_custom_call.1} parent=23 // pred_check
          %p222 = pneg %p221
        $region34: #{tpu_custom_call.1} parent=23 // pred_check_branch
          %224 = sbr.rel (%p222) target = $region36
        $region35: #{tpu_custom_call.1} parent=23 // pred_region
          %s225 = scalar_lea.vmem [#allocation2], 320
          %226 = vst [vmem:[%s225] sm:$0xff] 0.0
          %227 = vst [vmem:[%s225 + $0x8] sm:$0xff] 0.0
          %228 = vst [vmem:[%s225 + $0x10] sm:$0xff] 0.0
          %229 = vst [vmem:[%s225 + $0x18] sm:$0xff] 0.0
          %230 = vst [vmem:[%s225 + $0x20] sm:$0xff] 0.0
          %231 = vst [vmem:[%s225 + $0x28] sm:$0xff] 0.0
          %232 = vst [vmem:[%s225 + $0x30] sm:$0xff] 0.0
          %233 = vst [vmem:[%s225 + $0x38] sm:$0xff] 0.0
          %234 = vst [vmem:[%s225 + $0x40] sm:$0xff] 0.0
          %235 = vst [vmem:[%s225 + $0x48] sm:$0xff] 0.0
          %236 = vst [vmem:[%s225 + $0x50] sm:$0xff] 0.0
          %237 = vst [vmem:[%s225 + $0x58] sm:$0xff] 0.0
          %238 = vst [vmem:[%s225 + $0x60] sm:$0xff] 0.0
          %239 = vst [vmem:[%s225 + $0x68] sm:$0xff] 0.0
          %240 = vst [vmem:[%s225 + $0x70] sm:$0xff] 0.0
          %241 = vst [vmem:[%s225 + $0x78] sm:$0xff] 0.0
          %s242 = scalar_lea.vmem [#allocation4], 96
          %v243 = vld [vmem:[%s242] sm:$0xff]
          %v244 = vld [vmem:[%s242 + $0x8] sm:$0xff]
          %v245 = vld [vmem:[%s242 + $0x10] sm:$0xff]
          %v246 = vld [vmem:[%s242 + $0x18] sm:$0xff]
          %v247 = vld [vmem:[%s242 + $0x20] sm:$0xff]
          %v248 = vld [vmem:[%s242 + $0x28] sm:$0xff]
          %v249 = vld [vmem:[%s242 + $0x30] sm:$0xff]
          %v250 = vld [vmem:[%s242 + $0x38] sm:$0xff]
          %v251 = vld [vmem:[%s242 + $0x40] sm:$0xff]
          %v252 = vld [vmem:[%s242 + $0x48] sm:$0xff]
          %v253 = vld [vmem:[%s242 + $0x50] sm:$0xff]
          %v254 = vld [vmem:[%s242 + $0x58] sm:$0xff]
          %v255 = vld [vmem:[%s242 + $0x60] sm:$0xff]
          %v256 = vld [vmem:[%s242 + $0x68] sm:$0xff]
          %v257 = vld [vmem:[%s242 + $0x70] sm:$0xff]
          %v258 = vld [vmem:[%s242 + $0x78] sm:$0xff]
          %v259 = vld [vmem:[%s242 + $0x80] sm:$0xff]
          %v260 = vld [vmem:[%s242 + $0x88] sm:$0xff]
          %v261 = vld [vmem:[%s242 + $0x90] sm:$0xff]
          %v262 = vld [vmem:[%s242 + $0x98] sm:$0xff]
          %263 = vst [vmem:[#allocation2 + $0x8] sm:$0xff] %v243
          %264 = vst [vmem:[#allocation2 + $0x10] sm:$0xff] %v244
          %265 = vst [vmem:[#allocation2 + $0x28] sm:$0xff] %v245
          %266 = vst [vmem:[#allocation2 + $0x30] sm:$0xff] %v246
          %267 = vst [vmem:[#allocation2 + $0x48] sm:$0xff] %v247
          %268 = vst [vmem:[#allocation2 + $0x50] sm:$0xff] %v248
          %269 = vst [vmem:[#allocation2 + $0x68] sm:$0xff] %v249
          %270 = vst [vmem:[#allocation2 + $0x70] sm:$0xff] %v250
          %271 = vst [vmem:[#allocation2 + $0x88] sm:$0xff] %v251
          %272 = vst [vmem:[#allocation2 + $0x90] sm:$0xff] %v252
          %273 = vst [vmem:[#allocation2 + $0xa8] sm:$0xff] %v253
          %274 = vst [vmem:[#allocation2 + $0xb0] sm:$0xff] %v254
          %275 = vst [vmem:[#allocation2 + $0xc8] sm:$0xff] %v255
          %276 = vst [vmem:[#allocation2 + $0xd0] sm:$0xff] %v256
          %277 = vst [vmem:[#allocation2 + $0xe8] sm:$0xff] %v257
          %278 = vst [vmem:[#allocation2 + $0xf0] sm:$0xff] %v258
          %279 = vst [vmem:[#allocation2 + $0x108] sm:$0xff] %v259
          %280 = vst [vmem:[#allocation2 + $0x110] sm:$0xff] %v260
          %281 = vst [vmem:[#allocation2 + $0x128] sm:$0xff] %v261
          %282 = vst [vmem:[#allocation2 + $0x130] sm:$0xff] %v262
        $region36: #{tpu_custom_call.1} parent=23 // pred_fallthru
          _
        %p283 = scmp.gt.s32.totalorder %s20, 0
        %p284 = scmp.lt.s32.totalorder %s20, 2
        %p285 = pnand %p283, %p284
        %p286 = pneg %p285
        // Predicated region
        $region37: #{tpu_custom_call.1} parent=23 // pred_check
          _
        $region38: #{tpu_custom_call.1} parent=23 // pred_check_branch
          %288 = sbr.rel (%p285) target = $region40
        $region39: #{tpu_custom_call.1} parent=23 // pred_region
          %s289 = smul.u32 %s20, 5
          %s290 = ssub.s32 %s289, 4
          %s291 = smul.u32 %s290, 16
          %s292 = scalar_lea.vmem [#allocation4], %s291
          %v293 = vld [vmem:[%s292] sm:$0xff]
          %v294 = vld [vmem:[%s292 + $0x8] sm:$0xff]
          %v295 = vld [vmem:[%s292 + $0x10] sm:$0xff]
          %v296 = vld [vmem:[%s292 + $0x18] sm:$0xff]
          %v297 = vld [vmem:[%s292 + $0x20] sm:$0xff]
          %v298 = vld [vmem:[%s292 + $0x28] sm:$0xff]
          %v299 = vld [vmem:[%s292 + $0x30] sm:$0xff]
          %v300 = vld [vmem:[%s292 + $0x38] sm:$0xff]
          %v301 = vld [vmem:[%s292 + $0x40] sm:$0xff]
          %v302 = vld [vmem:[%s292 + $0x48] sm:$0xff]
          %v303 = vld [vmem:[%s292 + $0x50] sm:$0xff]
          %v304 = vld [vmem:[%s292 + $0x58] sm:$0xff]
          %v305 = vld [vmem:[%s292 + $0x60] sm:$0xff]
          %v306 = vld [vmem:[%s292 + $0x68] sm:$0xff]
          %v307 = vld [vmem:[%s292 + $0x70] sm:$0xff]
          %v308 = vld [vmem:[%s292 + $0x78] sm:$0xff]
          %v309 = vld [vmem:[%s292 + $0x80] sm:$0xff]
          %v310 = vld [vmem:[%s292 + $0x88] sm:$0xff]
          %v311 = vld [vmem:[%s292 + $0x90] sm:$0xff]
          %v312 = vld [vmem:[%s292 + $0x98] sm:$0xff]
          %v313 = vld [vmem:[%s292 + $0xa0] sm:$0xff]
          %v314 = vld [vmem:[%s292 + $0xa8] sm:$0xff]
          %v315 = vld [vmem:[%s292 + $0xb0] sm:$0xff]
          %v316 = vld [vmem:[%s292 + $0xb8] sm:$0xff]
          %v317 = vld [vmem:[%s292 + $0xc0] sm:$0xff]
          %v318 = vld [vmem:[%s292 + $0xc8] sm:$0xff]
          %v319 = vld [vmem:[%s292 + $0xd0] sm:$0xff]
          %v320 = vld [vmem:[%s292 + $0xd8] sm:$0xff]
          %321 = vst [vmem:[#allocation2 + $0x8] sm:$0xff] %v293
          %322 = vst [vmem:[#allocation2 + $0x10] sm:$0xff] %v294
          %323 = vst [vmem:[#allocation2 + $0x28] sm:$0xff] %v295
          %324 = vst [vmem:[#allocation2 + $0x30] sm:$0xff] %v296
          %325 = vst [vmem:[#allocation2 + $0x48] sm:$0xff] %v297
          %326 = vst [vmem:[#allocation2 + $0x50] sm:$0xff] %v298
          %327 = vst [vmem:[#allocation2 + $0x68] sm:$0xff] %v299
          %328 = vst [vmem:[#allocation2 + $0x70] sm:$0xff] %v300
          %329 = vst [vmem:[#allocation2 + $0x88] sm:$0xff] %v301
          %330 = vst [vmem:[#allocation2 + $0x90] sm:$0xff] %v302
          %331 = vst [vmem:[#allocation2 + $0xa8] sm:$0xff] %v303
          %332 = vst [vmem:[#allocation2 + $0xb0] sm:$0xff] %v304
          %333 = vst [vmem:[#allocation2 + $0xc8] sm:$0xff] %v305
          %334 = vst [vmem:[#allocation2 + $0xd0] sm:$0xff] %v306
          %335 = vst [vmem:[#allocation2 + $0xe8] sm:$0xff] %v307
          %336 = vst [vmem:[#allocation2 + $0xf0] sm:$0xff] %v308
          %337 = vst [vmem:[#allocation2 + $0x108] sm:$0xff] %v309
          %338 = vst [vmem:[#allocation2 + $0x110] sm:$0xff] %v310
          %339 = vst [vmem:[#allocation2 + $0x128] sm:$0xff] %v311
          %340 = vst [vmem:[#allocation2 + $0x130] sm:$0xff] %v312
          %341 = vst [vmem:[#allocation2 + $0x148] sm:$0xff] %v313
          %342 = vst [vmem:[#allocation2 + $0x150] sm:$0xff] %v314
          %343 = vst [vmem:[#allocation2 + $0x168] sm:$0xff] %v315
          %344 = vst [vmem:[#allocation2 + $0x170] sm:$0xff] %v316
          %345 = vst [vmem:[#allocation2 + $0x188] sm:$0xff] %v317
          %346 = vst [vmem:[#allocation2 + $0x190] sm:$0xff] %v318
          %347 = vst [vmem:[#allocation2 + $0x1a8] sm:$0xff] %v319
          %348 = vst [vmem:[#allocation2 + $0x1b0] sm:$0xff] %v320
        $region40: #{tpu_custom_call.1} parent=23 // pred_fallthru
          _
        %v349 = vld [vmem:[#allocation2] sm:$0xff]
        %v350 = vld [vmem:[#allocation2 + $0x8] sm:$0xff]
        %v351 = vld [vmem:[#allocation2 + $0x10] sm:$0xff]
        %v352 = vld [vmem:[#allocation2 + $0x18] sm:$0xff]
        %v353 = vld [vmem:[#allocation2 + $0x20] sm:$0xff]
        %v354 = vld [vmem:[#allocation2 + $0x28] sm:$0xff]
        %v355 = vld [vmem:[#allocation2 + $0x30] sm:$0xff]
        %v356 = vld [vmem:[#allocation2 + $0x38] sm:$0xff]
        %v357 = vld [vmem:[#allocation2 + $0x40] sm:$0xff]
        %v358 = vld [vmem:[#allocation2 + $0x48] sm:$0xff]
        %v359 = vld [vmem:[#allocation2 + $0x50] sm:$0xff]
        %v360 = vld [vmem:[#allocation2 + $0x58] sm:$0xff]
        %v361 = vld [vmem:[#allocation2 + $0x60] sm:$0xff]
        %v362 = vld [vmem:[#allocation2 + $0x68] sm:$0xff]
        %v363 = vld [vmem:[#allocation2 + $0x70] sm:$0xff]
        %v364 = vld [vmem:[#allocation2 + $0x78] sm:$0xff]
        %v365 = vld [vmem:[#allocation2 + $0x80] sm:$0xff]
        %v366 = vld [vmem:[#allocation2 + $0x88] sm:$0xff]
        %v367 = vld [vmem:[#allocation2 + $0x90] sm:$0xff]
        %v368 = vld [vmem:[#allocation2 + $0x98] sm:$0xff]
        %v369 = vld [vmem:[#allocation2 + $0xa0] sm:$0xff]
        %v370 = vld [vmem:[#allocation2 + $0xa8] sm:$0xff]
        %v371 = vld [vmem:[#allocation2 + $0xb0] sm:$0xff]
        %v372 = vld [vmem:[#allocation2 + $0xb8] sm:$0xff]
        %v373 = vld [vmem:[#allocation2 + $0xc0] sm:$0xff]
        %v374 = vld [vmem:[#allocation2 + $0xc8] sm:$0xff]
        %v375 = vld [vmem:[#allocation2 + $0xd0] sm:$0xff]
        %v376 = vld [vmem:[#allocation2 + $0xd8] sm:$0xff]
        %v377 = vld [vmem:[#allocation2 + $0xe0] sm:$0xff]
        %v378 = vld [vmem:[#allocation2 + $0xe8] sm:$0xff]
        %v379 = vld [vmem:[#allocation2 + $0xf0] sm:$0xff]
        %v380 = vld [vmem:[#allocation2 + $0xf8] sm:$0xff]
        %v381 = vld [vmem:[#allocation2 + $0x100] sm:$0xff]
        %v382 = vld [vmem:[#allocation2 + $0x108] sm:$0xff]
        %v383 = vld [vmem:[#allocation2 + $0x110] sm:$0xff]
        %v384 = vld [vmem:[#allocation2 + $0x118] sm:$0xff]
        %v385 = vld [vmem:[#allocation2 + $0x120] sm:$0xff]
        %v386 = vld [vmem:[#allocation2 + $0x128] sm:$0xff]
        %v387 = vld [vmem:[#allocation2 + $0x130] sm:$0xff]
        %v388 = vld [vmem:[#allocation2 + $0x138] sm:$0xff]
        %v389 = vld [vmem:[#allocation2 + $0x140] sm:$0xff]
        %v390 = vld [vmem:[#allocation2 + $0x148] sm:$0xff]
        %v391 = vld [vmem:[#allocation2 + $0x150] sm:$0xff]
        %v392 = vld [vmem:[#allocation2 + $0x158] sm:$0xff]
        %v393 = vld [vmem:[#allocation2 + $0x160] sm:$0xff]
        %v394 = vld [vmem:[#allocation2 + $0x168] sm:$0xff]
        %v395 = vld [vmem:[#allocation2 + $0x170] sm:$0xff]
        %v396 = vld [vmem:[#allocation2 + $0x178] sm:$0xff]
        %v397 = vld [vmem:[#allocation2 + $0x180] sm:$0xff]
        %v398 = vld [vmem:[#allocation2 + $0x188] sm:$0xff]
        %v399 = vld [vmem:[#allocation2 + $0x190] sm:$0xff]
        %v400 = vld [vmem:[#allocation2 + $0x198] sm:$0xff]
        %s401 = scalar_lea.vmem [#allocation2], 32
        %v402 = vld [vmem:[%s401] sm:$0xff]
        %v403 = vld [vmem:[%s401 + $0x8] sm:$0xff]
        %v404 = vld [vmem:[%s401 + $0x10] sm:$0xff]
        %v405 = vld [vmem:[%s401 + $0x18] sm:$0xff]
        %v406 = vld [vmem:[%s401 + $0x20] sm:$0xff]
        %v407 = vld [vmem:[%s401 + $0x28] sm:$0xff]
        %v408 = vld [vmem:[%s401 + $0x30] sm:$0xff]
        %v409 = vld [vmem:[%s401 + $0x38] sm:$0xff]
        %v410 = vld [vmem:[%s401 + $0x40] sm:$0xff]
        %v411 = vld [vmem:[%s401 + $0x48] sm:$0xff]
        %v412 = vld [vmem:[%s401 + $0x50] sm:$0xff]
        %v413 = vld [vmem:[%s401 + $0x58] sm:$0xff]
        %v414 = vld [vmem:[%s401 + $0x60] sm:$0xff]
        %v415 = vld [vmem:[%s401 + $0x68] sm:$0xff]
        %v416 = vld [vmem:[%s401 + $0x70] sm:$0xff]
        %v417 = vld [vmem:[%s401 + $0x78] sm:$0xff]
        %v418 = vld [vmem:[%s401 + $0x80] sm:$0xff]
        %v419 = vld [vmem:[%s401 + $0x88] sm:$0xff]
        %v420 = vld [vmem:[%s401 + $0x90] sm:$0xff]
        %v421 = vld [vmem:[%s401 + $0x98] sm:$0xff]
        %v422 = vld [vmem:[%s401 + $0xa0] sm:$0xff]
        %v423 = vld [vmem:[%s401 + $0xa8] sm:$0xff]
        %v424 = vld [vmem:[%s401 + $0xb0] sm:$0xff]
        %v425 = vld [vmem:[%s401 + $0xb8] sm:$0xff]
        %v426 = vld [vmem:[%s401 + $0xc0] sm:$0xff]
        %v427 = vld [vmem:[%s401 + $0xc8] sm:$0xff]
        %v428 = vld [vmem:[%s401 + $0xd0] sm:$0xff]
        %v429 = vld [vmem:[%s401 + $0xd8] sm:$0xff]
        %v430 = vld [vmem:[%s401 + $0xe0] sm:$0xff]
        %v431 = vld [vmem:[%s401 + $0xe8] sm:$0xff]
        %v432 = vld [vmem:[%s401 + $0xf0] sm:$0xff]
        %v433 = vld [vmem:[%s401 + $0xf8] sm:$0xff]
        %v434 = vld [vmem:[%s401 + $0x100] sm:$0xff]
        %v435 = vld [vmem:[%s401 + $0x108] sm:$0xff]
        %v436 = vld [vmem:[%s401 + $0x110] sm:$0xff]
        %v437 = vld [vmem:[%s401 + $0x118] sm:$0xff]
        %v438 = vld [vmem:[%s401 + $0x120] sm:$0xff]
        %v439 = vld [vmem:[%s401 + $0x128] sm:$0xff]
        %v440 = vld [vmem:[%s401 + $0x130] sm:$0xff]
        %v441 = vld [vmem:[%s401 + $0x138] sm:$0xff]
        %v442 = vld [vmem:[%s401 + $0x140] sm:$0xff]
        %v443 = vld [vmem:[%s401 + $0x148] sm:$0xff]
        %v444 = vld [vmem:[%s401 + $0x150] sm:$0xff]
        %v445 = vld [vmem:[%s401 + $0x158] sm:$0xff]
        %v446 = vld [vmem:[%s401 + $0x160] sm:$0xff]
        %v447 = vld [vmem:[%s401 + $0x168] sm:$0xff]
        %v448 = vld [vmem:[%s401 + $0x170] sm:$0xff]
        %v449 = vld [vmem:[%s401 + $0x178] sm:$0xff]
        %v450 = vld [vmem:[%s401 + $0x180] sm:$0xff]
        %v451 = vld [vmem:[%s401 + $0x188] sm:$0xff]
        %v452 = vld [vmem:[%s401 + $0x190] sm:$0xff]
        %v453 = vld [vmem:[%s401 + $0x198] sm:$0xff]
        %v454 = vadd.f32 %v349, %v402
        %v455 = vadd.f32 %v350, %v403
        %v456 = vadd.f32 %v351, %v404
        %v457 = vadd.f32 %v352, %v405
        %v458 = vadd.f32 %v353, %v406
        %v459 = vadd.f32 %v354, %v407
        %v460 = vadd.f32 %v355, %v408
        %v461 = vadd.f32 %v356, %v409
        %v462 = vadd.f32 %v357, %v410
        %v463 = vadd.f32 %v358, %v411
        %v464 = vadd.f32 %v359, %v412
        %v465 = vadd.f32 %v360, %v413
        %v466 = vadd.f32 %v361, %v414
        %v467 = vadd.f32 %v362, %v415
        %v468 = vadd.f32 %v363, %v416
        %v469 = vadd.f32 %v364, %v417
        %v470 = vadd.f32 %v365, %v418
        %v471 = vadd.f32 %v366, %v419
        %v472 = vadd.f32 %v367, %v420
        %v473 = vadd.f32 %v368, %v421
        %v474 = vadd.f32 %v369, %v422
        %v475 = vadd.f32 %v370, %v423
        %v476 = vadd.f32 %v371, %v424
        %v477 = vadd.f32 %v372, %v425
        %v478 = vadd.f32 %v373, %v426
        %v479 = vadd.f32 %v374, %v427
        %v480 = vadd.f32 %v375, %v428
        %v481 = vadd.f32 %v376, %v429
        %v482 = vadd.f32 %v377, %v430
        %v483 = vadd.f32 %v378, %v431
        %v484 = vadd.f32 %v379, %v432
        %v485 = vadd.f32 %v380, %v433
        %v486 = vadd.f32 %v381, %v434
        %v487 = vadd.f32 %v382, %v435
        %v488 = vadd.f32 %v383, %v436
        %v489 = vadd.f32 %v384, %v437
        %v490 = vadd.f32 %v385, %v438
        %v491 = vadd.f32 %v386, %v439
        %v492 = vadd.f32 %v387, %v440
        %v493 = vadd.f32 %v388, %v441
        %v494 = vadd.f32 %v389, %v442
        %v495 = vadd.f32 %v390, %v443
        %v496 = vadd.f32 %v391, %v444
        %v497 = vadd.f32 %v392, %v445
        %v498 = vadd.f32 %v393, %v446
        %v499 = vadd.f32 %v394, %v447
        %v500 = vadd.f32 %v395, %v448
        %v501 = vadd.f32 %v396, %v449
        %v502 = vadd.f32 %v397, %v450
        %v503 = vadd.f32 %v398, %v451
        %v504 = vadd.f32 %v399, %v452
        %v505 = vadd.f32 %v400, %v453
        %v506 = vadd.f32 %v454, %v462
        %v507 = vadd.f32 %v455, %v463
        %v508 = vadd.f32 %v456, %v464
        %v509 = vadd.f32 %v457, %v465
        %v510 = vadd.f32 %v458, %v466
        %v511 = vadd.f32 %v459, %v467
        %v512 = vadd.f32 %v460, %v468
        %v513 = vadd.f32 %v461, %v469
        %v514 = vadd.f32 %v462, %v470
        %v515 = vadd.f32 %v463, %v471
        %v516 = vadd.f32 %v464, %v472
        %v517 = vadd.f32 %v465, %v473
        %v518 = vadd.f32 %v466, %v474
        %v519 = vadd.f32 %v467, %v475
        %v520 = vadd.f32 %v468, %v476
        %v521 = vadd.f32 %v469, %v477
        %v522 = vadd.f32 %v470, %v478
        %v523 = vadd.f32 %v471, %v479
        %v524 = vadd.f32 %v472, %v480
        %v525 = vadd.f32 %v473, %v481
        %v526 = vadd.f32 %v474, %v482
        %v527 = vadd.f32 %v475, %v483
        %v528 = vadd.f32 %v476, %v484
        %v529 = vadd.f32 %v477, %v485
        %v530 = vadd.f32 %v478, %v486
        %v531 = vadd.f32 %v479, %v487
        %v532 = vadd.f32 %v480, %v488
        %v533 = vadd.f32 %v481, %v489
        %v534 = vadd.f32 %v482, %v490
        %v535 = vadd.f32 %v483, %v491
        %v536 = vadd.f32 %v484, %v492
        %v537 = vadd.f32 %v485, %v493
        %v538 = vadd.f32 %v486, %v494
        %v539 = vadd.f32 %v487, %v495
        %v540 = vadd.f32 %v488, %v496
        %v541 = vadd.f32 %v489, %v497
        %v542 = vadd.f32 %v506, %v522
        %v543 = vadd.f32 %v507, %v523
        %v544 = vadd.f32 %v508, %v524
        %v545 = vadd.f32 %v509, %v525
        %v546 = vadd.f32 %v510, %v526
        %v547 = vadd.f32 %v511, %v527
        %v548 = vadd.f32 %v512, %v528
        %v549 = vadd.f32 %v513, %v529
        %v550 = vadd.f32 %v514, %v530
        %v551 = vadd.f32 %v515, %v531
        %v552 = vadd.f32 %v516, %v532
        %v553 = vadd.f32 %v517, %v533
        %v554 = vadd.f32 %v518, %v534
        %v555 = vadd.f32 %v519, %v535
        %v556 = vadd.f32 %v520, %v536
        %v557 = vadd.f32 %v521, %v537
        %v558 = vadd.f32 %v522, %v538
        %v559 = vadd.f32 %v523, %v539
        %v560 = vadd.f32 %v524, %v540
        %v561 = vadd.f32 %v525, %v541
        %v562 = vadd.f32 %v542, %v486
        %v563 = vadd.f32 %v543, %v487
        %v564 = vadd.f32 %v544, %v488
        %v565 = vadd.f32 %v545, %v489
        %v566 = vadd.f32 %v546, %v490
        %v567 = vadd.f32 %v547, %v491
        %v568 = vadd.f32 %v548, %v492
        %v569 = vadd.f32 %v549, %v493
        %v570 = vadd.f32 %v550, %v494
        %v571 = vadd.f32 %v551, %v495
        %v572 = vadd.f32 %v552, %v496
        %v573 = vadd.f32 %v553, %v497
        %v574 = vadd.f32 %v554, %v498
        %v575 = vadd.f32 %v555, %v499
        %v576 = vadd.f32 %v556, %v500
        %v577 = vadd.f32 %v557, %v501
        %v578 = vadd.f32 %v558, %v502
        %v579 = vadd.f32 %v559, %v503
        %v580 = vadd.f32 %v560, %v504
        %v581 = vadd.f32 %v561, %v505
        %582 = vst [vmem:[#allocation3] sm:$0xff] %v562
        %583 = vst [vmem:[#allocation3 + $0x8] sm:$0xff] %v563
        %584 = vst [vmem:[#allocation3 + $0x10] sm:$0xff] %v564
        %585 = vst [vmem:[#allocation3 + $0x18] sm:$0xff] %v565
        %586 = vst [vmem:[#allocation3 + $0x20] sm:$0xff] %v566
        %587 = vst [vmem:[#allocation3 + $0x28] sm:$0xff] %v567
        %588 = vst [vmem:[#allocation3 + $0x30] sm:$0xff] %v568
        %589 = vst [vmem:[#allocation3 + $0x38] sm:$0xff] %v569
        %590 = vst [vmem:[#allocation3 + $0x40] sm:$0xff] %v570
        %591 = vst [vmem:[#allocation3 + $0x48] sm:$0xff] %v571
        %592 = vst [vmem:[#allocation3 + $0x50] sm:$0xff] %v572
        %593 = vst [vmem:[#allocation3 + $0x58] sm:$0xff] %v573
        %594 = vst [vmem:[#allocation3 + $0x60] sm:$0xff] %v574
        %595 = vst [vmem:[#allocation3 + $0x68] sm:$0xff] %v575
        %596 = vst [vmem:[#allocation3 + $0x70] sm:$0xff] %v576
        %597 = vst [vmem:[#allocation3 + $0x78] sm:$0xff] %v577
        %598 = vst [vmem:[#allocation3 + $0x80] sm:$0xff] %v578
        %599 = vst [vmem:[#allocation3 + $0x88] sm:$0xff] %v579
        %600 = vst [vmem:[#allocation3 + $0x90] sm:$0xff] %v580
        %601 = vst [vmem:[#allocation3 + $0x98] sm:$0xff] %v581
        %v602 = vld [vmem:[#allocation3] sm:$0xff]
        %v603 = vld [vmem:[#allocation3 + $0x8] sm:$0xff]
        %v604 = vld [vmem:[#allocation3 + $0x10] sm:$0xff]
        %v605 = vld [vmem:[#allocation3 + $0x18] sm:$0xff]
        %v606 = vld [vmem:[#allocation3 + $0x20] sm:$0xff]
        %v607 = vld [vmem:[#allocation3 + $0x28] sm:$0xff]
        %v608 = vld [vmem:[#allocation3 + $0x30] sm:$0xff]
        %v609 = vld [vmem:[#allocation3 + $0x38] sm:$0xff]
        %v610 = vld [vmem:[#allocation3 + $0x40] sm:$0xff]
        %v611 = vld [vmem:[#allocation3 + $0x48] sm:$0xff]
        %v612 = vld [vmem:[#allocation3 + $0x50] sm:$0xff]
        %v613 = vld [vmem:[#allocation3 + $0x58] sm:$0xff]
        %v614 = vld [vmem:[#allocation3 + $0x60] sm:$0xff]
        %v615 = vld [vmem:[#allocation3 + $0x68] sm:$0xff]
        %v616 = vld [vmem:[#allocation3 + $0x70] sm:$0xff]
        %v617 = vld [vmem:[#allocation3 + $0x78] sm:$0xff]
        %v618 = vld [vmem:[#allocation3 + $0x80] sm:$0xff]
        %v619 = vld [vmem:[#allocation3 + $0x88] sm:$0xff]
        %v620 = vld [vmem:[#allocation3 + $0x90] sm:$0xff]
        %v621 = vld [vmem:[#allocation3 + $0x98] sm:$0xff]
        %v622 = vrot.slane %v602, 1
        %v623 = vrot.slane %v606, 1
        %v624 = vrot.slane %v610, 1
        %v625 = vrot.slane %v614, 1
        %v626 = vrot.slane %v618, 1
        %v627 = vrot.slane %v603, 1
        %v628 = vrot.slane %v607, 1
        %v629 = vrot.slane %v611, 1
        %v630 = vrot.slane %v615, 1
        %v631 = vrot.slane %v619, 1
        %v632 = vrot.slane %v604, 1
        %v633 = vrot.slane %v608, 1
        %v634 = vrot.slane %v612, 1
        %v635 = vrot.slane %v616, 1
        %v636 = vrot.slane %v620, 1
        %v637 = vrot.slane %v605, 1
        %v638 = vrot.slane %v609, 1
        %v639 = vrot.slane %v613, 1
        %v640 = vrot.slane %v617, 1
        %v641 = vrot.slane %v621, 1
        %v642 = vlaneseq
        %v643 = vshrl.u32 %v642, 7
        %vm644 = vcmp.lt.s32.totalorder %v643, 7
        %v645 = vsel %vm644, %v632, %v637
        %v646 = vsel %vm644, %v633, %v638
        %v647 = vsel %vm644, %v634, %v639
        %v648 = vsel %vm644, %v635, %v640
        %v649 = vsel %vm644, %v636, %v641
        %v650 = vsel %vm644, %v627, %v632
        %v651 = vsel %vm644, %v628, %v633
        %v652 = vsel %vm644, %v629, %v634
        %v653 = vsel %vm644, %v630, %v635
        %v654 = vsel %vm644, %v631, %v636
        %v655 = vsel %vm644, %v622, %v627
        %v656 = vsel %vm644, %v623, %v628
        %v657 = vsel %vm644, %v624, %v629
        %v658 = vsel %vm644, %v625, %v630
        %v659 = vsel %vm644, %v626, %v631
        %v660 = vsel %vm644, %v637, %v622
        %v661 = vsel %vm644, %v638, %v623
        %v662 = vsel %vm644, %v639, %v624
        %v663 = vsel %vm644, %v640, %v625
        %v664 = vsel %vm644, %v641, %v626
        %v665 = vadd.f32 %v602, %v655
        %v666 = vadd.f32 %v603, %v650
        %v667 = vadd.f32 %v604, %v645
        %v668 = vadd.f32 %v605, %v660
        %v669 = vadd.f32 %v606, %v656
        %v670 = vadd.f32 %v607, %v651
        %v671 = vadd.f32 %v608, %v646
        %v672 = vadd.f32 %v609, %v661
        %v673 = vadd.f32 %v610, %v657
        %v674 = vadd.f32 %v611, %v652
        %v675 = vadd.f32 %v612, %v647
        %v676 = vadd.f32 %v613, %v662
        %v677 = vadd.f32 %v614, %v658
        %v678 = vadd.f32 %v615, %v653
        %v679 = vadd.f32 %v616, %v648
        %v680 = vadd.f32 %v617, %v663
        %v681 = vadd.f32 %v618, %v659
        %v682 = vadd.f32 %v619, %v654
        %v683 = vadd.f32 %v620, %v649
        %v684 = vadd.f32 %v621, %v664
        %v685 = vrot.slane %v665, 2
        %v686 = vrot.slane %v669, 2
        %v687 = vrot.slane %v673, 2
        %v688 = vrot.slane %v677, 2
        %v689 = vrot.slane %v681, 2
        %v690 = vrot.slane %v666, 2
        %v691 = vrot.slane %v670, 2
        %v692 = vrot.slane %v674, 2
        %v693 = vrot.slane %v678, 2
        %v694 = vrot.slane %v682, 2
        %v695 = vrot.slane %v667, 2
        %v696 = vrot.slane %v671, 2
        %v697 = vrot.slane %v675, 2
        %v698 = vrot.slane %v679, 2
        %v699 = vrot.slane %v683, 2
        %v700 = vrot.slane %v668, 2
        %v701 = vrot.slane %v672, 2
        %v702 = vrot.slane %v676, 2
        %v703 = vrot.slane %v680, 2
        %v704 = vrot.slane %v684, 2
        %vm705 = vcmp.lt.s32.totalorder %v643, 6
        %v706 = vsel %vm705, %v695, %v700
        %v707 = vsel %vm705, %v696, %v701
        %v708 = vsel %vm705, %v697, %v702
        %v709 = vsel %vm705, %v698, %v703
        %v710 = vsel %vm705, %v699, %v704
        %v711 = vsel %vm705, %v690, %v695
        %v712 = vsel %vm705, %v691, %v696
        %v713 = vsel %vm705, %v692, %v697
        %v714 = vsel %vm705, %v693, %v698
        %v715 = vsel %vm705, %v694, %v699
        %v716 = vsel %vm705, %v685, %v690
        %v717 = vsel %vm705, %v686, %v691
        %v718 = vsel %vm705, %v687, %v692
        %v719 = vsel %vm705, %v688, %v693
        %v720 = vsel %vm705, %v689, %v694
        %v721 = vsel %vm705, %v700, %v685
        %v722 = vsel %vm705, %v701, %v686
        %v723 = vsel %vm705, %v702, %v687
        %v724 = vsel %vm705, %v703, %v688
        %v725 = vsel %vm705, %v704, %v689
        %v726 = vadd.f32 %v665, %v716
        %v727 = vadd.f32 %v666, %v711
        %v728 = vadd.f32 %v667, %v706
        %v729 = vadd.f32 %v668, %v721
        %v730 = vadd.f32 %v669, %v717
        %v731 = vadd.f32 %v670, %v712
        %v732 = vadd.f32 %v671, %v707
        %v733 = vadd.f32 %v672, %v722
        %v734 = vadd.f32 %v673, %v718
        %v735 = vadd.f32 %v674, %v713
        %v736 = vadd.f32 %v675, %v708
        %v737 = vadd.f32 %v676, %v723
        %v738 = vadd.f32 %v677, %v719
        %v739 = vadd.f32 %v678, %v714
        %v740 = vadd.f32 %v679, %v709
        %v741 = vadd.f32 %v680, %v724
        %v742 = vadd.f32 %v681, %v720
        %v743 = vadd.f32 %v682, %v715
        %v744 = vadd.f32 %v683, %v710
        %v745 = vadd.f32 %v684, %v725
        %v746 = vrot.slane %v726, 4
        %v747 = vrot.slane %v730, 4
        %v748 = vrot.slane %v734, 4
        %v749 = vrot.slane %v738, 4
        %v750 = vrot.slane %v742, 4
        %v751 = vrot.slane %v727, 4
        %v752 = vrot.slane %v731, 4
        %v753 = vrot.slane %v735, 4
        %v754 = vrot.slane %v739, 4
        %v755 = vrot.slane %v743, 4
        %v756 = vrot.slane %v728, 4
        %v757 = vrot.slane %v732, 4
        %v758 = vrot.slane %v736, 4
        %v759 = vrot.slane %v740, 4
        %v760 = vrot.slane %v744, 4
        %v761 = vrot.slane %v729, 4
        %v762 = vrot.slane %v733, 4
        %v763 = vrot.slane %v737, 4
        %v764 = vrot.slane %v741, 4
        %v765 = vrot.slane %v745, 4
        %vm766 = vcmp.lt.s32.totalorder %v643, 4
        %v767 = vsel %vm766, %v756, %v761
        %v768 = vsel %vm766, %v757, %v762
        %v769 = vsel %vm766, %v758, %v763
        %v770 = vsel %vm766, %v759, %v764
        %v771 = vsel %vm766, %v760, %v765
        %v772 = vsel %vm766, %v751, %v756
        %v773 = vsel %vm766, %v752, %v757
        %v774 = vsel %vm766, %v753, %v758
        %v775 = vsel %vm766, %v754, %v759
        %v776 = vsel %vm766, %v755, %v760
        %v777 = vsel %vm766, %v746, %v751
        %v778 = vsel %vm766, %v747, %v752
        %v779 = vsel %vm766, %v748, %v753
        %v780 = vsel %vm766, %v749, %v754
        %v781 = vsel %vm766, %v750, %v755
        %v782 = vadd.f32 %v726, %v777
        %v783 = vadd.f32 %v727, %v772
        %v784 = vadd.f32 %v728, %v767
        %v785 = vadd.f32 %v730, %v778
        %v786 = vadd.f32 %v731, %v773
        %v787 = vadd.f32 %v732, %v768
        %v788 = vadd.f32 %v734, %v779
        %v789 = vadd.f32 %v735, %v774
        %v790 = vadd.f32 %v736, %v769
        %v791 = vadd.f32 %v738, %v780
        %v792 = vadd.f32 %v739, %v775
        %v793 = vadd.f32 %v740, %v770
        %v794 = vadd.f32 %v742, %v781
        %v795 = vadd.f32 %v743, %v776
        %v796 = vadd.f32 %v744, %v771
        %v797 = vrot.slane %v782, 4
        %v798 = vrot.slane %v785, 4
        %v799 = vrot.slane %v788, 4
        %v800 = vrot.slane %v791, 4
        %v801 = vrot.slane %v794, 4
        %v802 = vrot.slane %v783, 4
        %v803 = vrot.slane %v786, 4
        %v804 = vrot.slane %v789, 4
        %v805 = vrot.slane %v792, 4
        %v806 = vrot.slane %v795, 4
        %v807 = vrot.slane %v784, 4
        %v808 = vrot.slane %v787, 4
        %v809 = vrot.slane %v790, 4
        %v810 = vrot.slane %v793, 4
        %v811 = vrot.slane %v796, 4
        %v812 = vsel %vm766, %v802, %v807
        %v813 = vsel %vm766, %v803, %v808
        %v814 = vsel %vm766, %v804, %v809
        %v815 = vsel %vm766, %v805, %v810
        %v816 = vsel %vm766, %v806, %v811
        %v817 = vsel %vm766, %v797, %v802
        %v818 = vsel %vm766, %v798, %v803
        %v819 = vsel %vm766, %v799, %v804
        %v820 = vsel %vm766, %v800, %v805
        %v821 = vsel %vm766, %v801, %v806
        %v822 = vrot.slane %v666, 4
        %v823 = vrot.slane %v670, 4
        %v824 = vrot.slane %v674, 4
        %v825 = vrot.slane %v678, 4
        %v826 = vrot.slane %v682, 4
        %v827 = vrot.slane %v667, 4
        %v828 = vrot.slane %v671, 4
        %v829 = vrot.slane %v675, 4
        %v830 = vrot.slane %v679, 4
        %v831 = vrot.slane %v683, 4
        %v832 = vrot.slane %v668, 4
        %v833 = vrot.slane %v672, 4
        %v834 = vrot.slane %v676, 4
        %v835 = vrot.slane %v680, 4
        %v836 = vrot.slane %v684, 4
        %v837 = vsel %vm766, %v827, %v832
        %v838 = vsel %vm766, %v828, %v833
        %v839 = vsel %vm766, %v829, %v834
        %v840 = vsel %vm766, %v830, %v835
        %v841 = vsel %vm766, %v831, %v836
        %v842 = vsel %vm766, %v822, %v827
        %v843 = vsel %vm766, %v823, %v828
        %v844 = vsel %vm766, %v824, %v829
        %v845 = vsel %vm766, %v825, %v830
        %v846 = vsel %vm766, %v826, %v831
        %v847 = vadd.f32 %v817, %v842
        %v848 = vadd.f32 %v812, %v837
        %v849 = vadd.f32 %v818, %v843
        %v850 = vadd.f32 %v813, %v838
        %v851 = vadd.f32 %v819, %v844
        %v852 = vadd.f32 %v814, %v839
        %v853 = vadd.f32 %v820, %v845
        %v854 = vadd.f32 %v815, %v840
        %v855 = vadd.f32 %v821, %v846
        %v856 = vadd.f32 %v816, %v841
        %v857 = vmul.f32 %v847, 0.01
        %v858 = vmul.f32 %v848, 0.01
        %v859 = vmul.f32 %v849, 0.01
        %v860 = vmul.f32 %v850, 0.01
        %v861 = vmul.f32 %v851, 0.01
        %v862 = vmul.f32 %v852, 0.01
        %v863 = vmul.f32 %v853, 0.01
        %v864 = vmul.f32 %v854, 0.01
        %v865 = vmul.f32 %v855, 0.01
        %v866 = vmul.f32 %v856, 0.01
        %867 = vst [vmem:[%s130] sm:$0xff] %v857
        %868 = vst [vmem:[%s130 + $0x8] sm:$0x7f] %v858
        %869 = vst [vmem:[%s130 + $0x10] sm:$0xff] %v859
        %870 = vst [vmem:[%s130 + $0x18] sm:$0x7f] %v860
        %871 = vst [vmem:[%s130 + $0x20] sm:$0xff] %v861
        %872 = vst [vmem:[%s130 + $0x28] sm:$0x7f] %v862
        %873 = vst [vmem:[%s130 + $0x30] sm:$0xff] %v863
        %874 = vst [vmem:[%s130 + $0x38] sm:$0x7f] %v864
        %875 = vst [vmem:[%s130 + $0x40] sm:$0xff] %v865
        %876 = vst [vmem:[%s130 + $0x48] sm:$0x7f] %v866
        %s877 = sand.u32 %s64, 1
        %s878 = scalar_lea.sflag [#allocation6], %s877
        %s879 = sand.u32 %s64, 1
        %s880 = smul.addr %s879, 80
        %s881 = scalar_lea.vmem [#allocation7], %s880
        // Predicated region
        $region41: #{tpu_custom_call.1} parent=23 // pred_check
          %p882 = pneg %p74
        $region42: #{tpu_custom_call.1} parent=23 // pred_check_branch
          %884 = sbr.rel (%p882) target = $region44
        $region43: #{tpu_custom_call.1} parent=23 // pred_region
          %s885 = smul.u32 5, %s20
          %s887 = ssub.s32 1280, 1280
          %888 = vsyncadd %s878, %s887
          %s889 = smul.addr %s885, 2
          %s890 = sadd.s32 %s21, %s889
          %s891 = smul.addr %s890, 128
          %s892 = scalar_lea.hbm %s1, %s891
          %s893 = sshll.u32 %s881, 4
          %s894 = int_to_ptr.vmem [resolvable:$true] %s893
          %899 = dma.vmem_to_hbm [thread:$0]  %s894, 1280, %s892, %s878, 128, 128, 8
        $region44: #{tpu_custom_call.1} parent=23 // pred_fallthru
          _
      $region24: #{tpu_custom_call.1} parent=5 // pred_fallthru
        _
      %p900 = scmp.le.s32.totalorder 2, %s11
      // Predicated region
      $region45: #{tpu_custom_call.1} parent=5 // pred_check
        %p901 = pneg %p900
      $region46: #{tpu_custom_call.1} parent=5 // pred_check_branch
        %903 = sbr.rel (%p901) target = $region48
      $region47: #{tpu_custom_call.1} parent=5 // pred_region
        %s904 = ssub.s32 %s11, 2
        // Predicated region
        $region49: #{tpu_custom_call.1} parent=47 // pred_check
          %p905 = pneg %p80
        $region50: #{tpu_custom_call.1} parent=47 // pred_check_branch
          %907 = sbr.rel (%p905) target = $region52
        $region51: #{tpu_custom_call.1} parent=47 // pred_region
          %s908 = sand.u32 %s65, 1
          %s909 = scalar_lea.sflag [#allocation6], %s908
          %s910 = sand.u32 %s65, 1
          %s911 = smul.addr %s910, 80
          %s912 = scalar_lea.vmem [#allocation7], %s911
          %913 = dma.done %s909, 1280
        $region52: #{tpu_custom_call.1} parent=47 // pred_fallthru
          _
      $region48: #{tpu_custom_call.1} parent=5 // pred_fallthru
        _
    $region6: #{tpu_custom_call.1} parent=1 // loop_footer
      %s15 = sadd.s32 1, %s11
    $region7: #{tpu_custom_call.1} parent=1 // loop_footer_branch
      %10 = sbr.rel target = $region3
    $region8: #{tpu_custom_call.1} parent=1 // loop_exit
      _
    %914 = vsyncpa [#allocation5], 1
    %s915 = scalar_lea.sflag [#allocation5], 1
    %916 = vsyncpa %s915, 1
    %917 = vsyncpa [#allocation6], 1
    %s918 = scalar_lea.sflag [#allocation6], 1
    %919 = vsyncpa %s918, 1

</llo_original>
